<compile_context>
chip_gen: v7x
topology: tpu7x:2x2x1
jax: 0.10.0
libtpu: 0.0.40
codegen_flags: <defaults>
</compile_context>

<pallas_src>
import functools

import jax
import jax.numpy as jnp
from jax.experimental import pallas as pl
from jax.experimental.pallas import tpu as pltpu


def _contrastive_tile_kernel(chunk_feat_ref, featT_ref, chunk_lab_ref,
                             lab_row_ref, out_ref, *,
                             chunk_size, chunks_per_tile, batch_real,
                             batch_padded):
    tile_m = chunks_per_tile * chunk_size

    # Similarity: bf16 (or f32) MXU matmul with f32 accumulation.
    # 1/temperature is pre-folded into featT by the wrapper.
    sim = jnp.dot(chunk_feat_ref[...], featT_ref[...],
                  preferred_element_type=jnp.float32)            # (M, B) f32

    # Positive-pair mask (kept boolean, never cast to float):
    #   same label AND col != local row index — exactly the reference's
    #   eye(chunk, B) self-exclusion quirk for every chunk.
    cl = chunk_lab_ref[...]                                      # (M, 1) i32
    lb = lab_row_ref[...]                                        # (1, B) i32
    local_r = jax.lax.broadcasted_iota(jnp.int32, (tile_m, 1), 0)
    if chunks_per_tile > 1:
        local_r = jnp.bitwise_and(local_r, chunk_size - 1)       # chunk_size==32
    col = jax.lax.broadcasted_iota(jnp.int32, (1, batch_padded), 1)
    mask = jnp.logical_and(cl == lb, col != local_r)             # (M, B) bool

    # Row-wise stable log-sum-exp over *real* columns only (padded feature
    # columns must not contribute to the denominator).
    if batch_padded != batch_real:
        sim_lse = jnp.where(col < batch_real, sim, jnp.float32(-1e30))
    else:
        sim_lse = sim
    row_max = jnp.max(sim_lse, axis=1, keepdims=True)            # (M, 1)
    lse = row_max + jnp.log(
        jnp.sum(jnp.exp(sim_lse - row_max), axis=1, keepdims=True))

    # Per-row masked reductions:  sum_j mask*(sim - lse) = masked_sum - lse*cnt
    masked_sum = jnp.sum(jnp.where(mask, sim, 0.0), axis=1, keepdims=True)
    cnt = jnp.sum(jnp.where(mask, 1.0, 0.0), axis=1, keepdims=True)
    numer_row = masked_sum - lse * cnt                           # (M, 1)

    # Per-chunk loss over the fused chunks (static tiny loop; (32,1) sums).
    tile_loss = jnp.float32(0.0)
    tile_valid = jnp.float32(0.0)
    for cc in range(chunks_per_tile):
        sl = slice(cc * chunk_size, (cc + 1) * chunk_size)
        psum = jnp.sum(cnt[sl, :])
        numer = jnp.sum(numer_row[sl, :])
        valid = psum > 0.0
        tile_loss = tile_loss + jnp.where(
            valid, -numer / jnp.where(valid, psum, 1.0), 0.0)
        tile_valid = tile_valid + jnp.where(valid, 1.0, 0.0)

    # Lane-dense per-tile partial output: lane 0 = loss sum, lane 1 = #valid.
    lane = jax.lax.broadcasted_iota(jnp.int32, (1, 8, 128), 2)
    out_ref[...] = jnp.where(lane == 0, tile_loss,
                             jnp.where(lane == 1, tile_valid, 0.0))


def memory_efficient_contrastive_loss(features, labels, temperature=0.07,
                                      matmul_dtype=jnp.bfloat16):
    """features: (B, D) float, labels: (B,) int. Returns scalar f32 loss."""
    features = jnp.asarray(features, jnp.float32)
    labels = jnp.asarray(labels, jnp.int32)
    batch_size, dim = features.shape
    if batch_size < 2:
        return jnp.float32(0.0)

    chunk_size = min(32, batch_size)
    b_pad = ((batch_size + chunk_size - 1) // chunk_size) * chunk_size
    num_chunks = b_pad // chunk_size

    # Ragged trailing chunk: pad rows / columns with labels that never match
    # anything real (row pad = max+1, column pad = max+2) and zero features.
    if b_pad != batch_size:
        pad_n = b_pad - batch_size
        row_pad = jnp.max(labels) + 1
        col_pad = row_pad + 1
        feats_p = jnp.concatenate(
            [features, jnp.zeros((pad_n, dim), jnp.float32)], axis=0)
        labels_col = jnp.concatenate(
            [labels, jnp.full((pad_n,), row_pad, jnp.int32)])
        labels_row = jnp.concatenate(
            [labels, jnp.full((pad_n,), col_pad, jnp.int32)])
    else:
        feats_p, labels_col, labels_row = features, labels, labels

    # Fuse up to 8 reference chunks per grid step (tile_m <= 256 rows), backing
    # off if the (tile_m, B) f32 intermediates would crowd VMEM.
    chunks_per_tile = 1
    for cand in (8, 4, 2, 1):
        if (num_chunks % cand == 0
                and cand * chunk_size * b_pad * 4 * 8 <= 24 * (1 << 20)):
            chunks_per_tile = cand
            break
    tile_m = chunks_per_tile * chunk_size
    num_tiles = num_chunks // chunks_per_tile

    # bf16 operands feed the MXU natively on v5e/v6e/v7x; accumulation stays in
    # f32.  Fold 1/temperature into the resident RHS once here (zero kernel
    # cost instead of an (M, B) or (M, D) multiply per step).
    inv_t = float(1.0 / temperature)
    lhs = feats_p.astype(matmul_dtype)                      # (B_pad, D)
    rhs = (feats_p.T * inv_t).astype(matmul_dtype)          # (D, B_pad)
    labels_col = labels_col.reshape(b_pad, 1)
    labels_row = labels_row.reshape(1, b_pad)

    kernel = functools.partial(
        _contrastive_tile_kernel,
        chunk_size=chunk_size, chunks_per_tile=chunks_per_tile,
        batch_real=batch_size, batch_padded=b_pad)

    item = jnp.dtype(matmul_dtype).itemsize
    vmem_est = (2 * dim * b_pad * item            # resident (D, B) RHS (x2 buf)
                + 2 * tile_m * dim * item         # double-buffered LHS tiles
                + 2 * (tile_m + b_pad) * 4        # label tiles
                + 8 * tile_m * b_pad * 4          # (M, B) f32 intermediates
                + 2 * 8 * 128 * 4)                # output tiles
    vmem_limit = int(min(max(2 * vmem_est, 32 * (1 << 20)), 100 * (1 << 20)))

    partials = pl.pallas_call(
        kernel,
        out_shape=jax.ShapeDtypeStruct((num_tiles, 8, 128), jnp.float32),
        grid_spec=pltpu.PrefetchScalarGridSpec(
            num_scalar_prefetch=0,
            grid=(num_tiles,),
            in_specs=[
                # fused chunk of features: one (tile_m, D) tile per grid step
                pl.BlockSpec((tile_m, dim), lambda t: (t, 0)),
                # pre-transposed, pre-scaled full feature matrix (resident)
                pl.BlockSpec((dim, b_pad), lambda t: (0, 0)),
                # fused chunk labels as a column
                pl.BlockSpec((tile_m, 1), lambda t: (t, 0)),
                # all labels as a row (resident)
                pl.BlockSpec((1, b_pad), lambda t: (0, 0)),
            ],
            out_specs=pl.BlockSpec((1, 8, 128), lambda t: (t, 0, 0)),
        ),
        compiler_params=pltpu.CompilerParams(
            dimension_semantics=("parallel",),
            vmem_limit_bytes=vmem_limit),
    )(lhs, rhs, labels_col, labels_row)

    loss_sum = jnp.sum(partials[:, 0, 0])
    valid_cnt = jnp.sum(partials[:, 0, 1])
    return loss_sum / jnp.maximum(valid_cnt, 1.0)


def _reference_loss(features, labels, temperature=0.07):
    """Pure-JAX transcription of the PyTorch forward, for verification."""
    B = features.shape[0]
    if B < 2:
        return jnp.float32(0.0)
    chunk_size = min(32, B)
    total, n = 0.0, 0
    for i in range(0, B, chunk_size):
        cf = features[i:i + chunk_size]
        cl = labels[i:i + chunk_size]
        sim = (cf @ features.T) / temperature
        lm = (cl[:, None] == labels[None, :]).astype(jnp.float32)
        eye = jnp.eye(cf.shape[0], B, dtype=jnp.float32)
        lm = lm * (1.0 - eye)
        log_prob = sim - jnp.log(jnp.sum(jnp.exp(sim), axis=1, keepdims=True))
        psum = lm.sum()
        if float(psum) > 0:
            total = total + (-(log_prob * lm).sum() / psum)
            n += 1
    return jnp.float32(total / max(n, 1))


if __name__ == "__main__":
    key = jax.random.PRNGKey(0)

    cases = [
        (64, 32),     # 2 chunks fused into one 64-row tile
        (256, 32),    # 8 chunks fused into one 256-row tile
        (1024, 64),   # 32 chunks -> 4 grid steps of 256 rows ("parallel" axis)
        (80, 32),     # ragged batch: partial trailing chunk
        (16, 32),     # batch < 32: single small chunk
    ]
    for (B, D) in cases:
        kf, kl, key = jax.random.split(key, 3)
        features = jax.random.normal(kf, (B, D), dtype=jnp.float32)
        # unit-normalize embeddings (typical contrastive setup; keeps exp finite)
        features = features / jnp.linalg.norm(features, axis=1, keepdims=True)
        labels = jax.random.randint(kl, (B,), 0, 4, dtype=jnp.int32)

        ref = _reference_loss(features, labels, temperature=0.07)

        out_bf16 = jax.block_until_ready(
            memory_efficient_contrastive_loss(features, labels, 0.07,
                                              matmul_dtype=jnp.bfloat16))
        out_f32 = jax.block_until_ready(
            memory_efficient_contrastive_loss(features, labels, 0.07,
                                              matmul_dtype=jnp.float32))

        assert bool(jnp.isfinite(out_bf16)) and bool(jnp.isfinite(out_f32))
        # Tolerance covers bf16 MXU operands / TPU default matmul precision.
        assert jnp.allclose(out_bf16, ref, rtol=2e-2, atol=2e-2), \
            ("bf16", B, D, float(out_bf16), float(ref))
        assert jnp.allclose(out_f32, ref, rtol=2e-2, atol=2e-2), \
            ("f32", B, D, float(out_f32), float(ref))

    print("KERNEL_OK")
</pallas_src>

<mosaic_0001>
module attributes {stable_mosaic.version = 11 : i64} {
  func.func @_contrastive_tile_kernel(%arg0: i32, %arg1: memref<64x32xbf16, #tpu.memory_space<vmem>>, %arg2: memref<32x64xbf16, #tpu.memory_space<vmem>>, %arg3: memref<64x1xi32, #tpu.memory_space<vmem>>, %arg4: memref<1x64xi32, #tpu.memory_space<vmem>>, %arg5: memref<1x8x128xf32, #tpu.memory_space<vmem>>) attributes {dimension_semantics = [#tpu.dimension_semantics<parallel>], iteration_bounds = array<i64: 1>, scalar_prefetch = 0 : i64, scratch_operands = 0 : i64, tpu.core_type = #tpu.core_type<tc>, window_params = [{transform_indices = @transform_0, window_bounds = array<i64: 64, 32>}, {pipeline_mode = #tpu.pipeline_mode<synchronous>, transform_indices = @transform_1, window_bounds = array<i64: 32, 64>}, {transform_indices = @transform_2, window_bounds = array<i64: 64, 1>}, {pipeline_mode = #tpu.pipeline_mode<synchronous>, transform_indices = @transform_3, window_bounds = array<i64: 1, 64>}, {transform_indices = @transform_4, window_bounds = array<i64: 1, 8, 128>}]} {
    %c0 = arith.constant 0 : index
    %c0_0 = arith.constant 0 : index
    %0 = vector.load %arg1[%c0, %c0_0] : memref<64x32xbf16, #tpu.memory_space<vmem>>, vector<64x32xbf16>
    %c0_1 = arith.constant 0 : index
    %c0_2 = arith.constant 0 : index
    %1 = vector.load %arg2[%c0_1, %c0_2] : memref<32x64xbf16, #tpu.memory_space<vmem>>, vector<32x64xbf16>
    %cst = arith.constant dense<0.000000e+00> : vector<64x64xf32>
    %2 = tpu.matmul %0, %1, %cst {dimension_numbers = #tpu.dot_dimension_numbers<[1], [0], [0], [1], [0, 0, 1, 1], [], []>} : vector<64x32xbf16>, vector<32x64xbf16>, vector<64x64xf32> -> vector<64x64xf32>
    %c0_3 = arith.constant 0 : index
    %c0_4 = arith.constant 0 : index
    %3 = vector.load %arg3[%c0_3, %c0_4] : memref<64x1xi32, #tpu.memory_space<vmem>>, vector<64x1xi32>
    %c0_5 = arith.constant 0 : index
    %c0_6 = arith.constant 0 : index
    %4 = vector.load %arg4[%c0_5, %c0_6] : memref<1x64xi32, #tpu.memory_space<vmem>>, vector<1x64xi32>
    %5 = tpu.iota {dimensions = array<i32: 0>} : vector<64x1xi32>
    %c31_i32 = arith.constant 31 : i32
    %6 = vector.broadcast %c31_i32 : i32 to vector<64x1xi32>
    %7 = arith.andi %5, %6 : vector<64x1xi32>
    %8 = tpu.iota {dimensions = array<i32: 1>} : vector<1x64xi32>
    %9 = vector.broadcast %3 : vector<64x1xi32> to vector<64x64xi32>
    %10 = vector.broadcast %4 : vector<1x64xi32> to vector<64x64xi32>
    %11 = arith.cmpi eq, %9, %10 : vector<64x64xi32>
    %12 = vector.broadcast %8 : vector<1x64xi32> to vector<64x64xi32>
    %13 = vector.broadcast %7 : vector<64x1xi32> to vector<64x64xi32>
    %14 = arith.cmpi ne, %12, %13 : vector<64x64xi32>
    %15 = arith.andi %11, %14 : vector<64x64xi1>
    %cst_7 = arith.constant dense<0xFF800000> : vector<64xf32>
    %16 = vector.multi_reduction <maximumf>, %2, %cst_7 [1] : vector<64x64xf32> to vector<64xf32>
    %17 = vector.shape_cast %16 : vector<64xf32> to vector<64x1xf32>
    %18 = vector.broadcast %17 : vector<64x1xf32> to vector<64x64xf32>
    %19 = arith.subf %2, %18 : vector<64x64xf32>
    %20 = math.exp %19 : vector<64x64xf32>
    %cst_8 = arith.constant dense<0.000000e+00> : vector<64xf32>
    %21 = vector.multi_reduction <add>, %20, %cst_8 [1] : vector<64x64xf32> to vector<64xf32>
    %22 = vector.shape_cast %21 : vector<64xf32> to vector<64x1xf32>
    %23 = math.log %22 : vector<64x1xf32>
    %24 = arith.addf %17, %23 : vector<64x1xf32>
    %cst_9 = arith.constant 0.000000e+00 : f32
    %25 = vector.broadcast %cst_9 : f32 to vector<64x64xf32>
    %26 = arith.select %15, %2, %25 : vector<64x64xi1>, vector<64x64xf32>
    %cst_10 = arith.constant dense<0.000000e+00> : vector<64xf32>
    %27 = vector.multi_reduction <add>, %26, %cst_10 [1] : vector<64x64xf32> to vector<64xf32>
    %28 = vector.shape_cast %27 : vector<64xf32> to vector<64x1xf32>
    %cst_11 = arith.constant 1.000000e+00 : f32
    %cst_12 = arith.constant 0.000000e+00 : f32
    %29 = vector.broadcast %cst_11 : f32 to vector<64x64xf32>
    %30 = vector.broadcast %cst_12 : f32 to vector<64x64xf32>
    %31 = arith.select %15, %29, %30 : vector<64x64xi1>, vector<64x64xf32>
    %cst_13 = arith.constant dense<0.000000e+00> : vector<64xf32>
    %32 = vector.multi_reduction <add>, %31, %cst_13 [1] : vector<64x64xf32> to vector<64xf32>
    %33 = vector.shape_cast %32 : vector<64xf32> to vector<64x1xf32>
    %34 = arith.mulf %24, %33 : vector<64x1xf32>
    %35 = arith.subf %28, %34 : vector<64x1xf32>
    %36 = vector.extract_strided_slice %33 {offsets = [0, 0], sizes = [32, 1], strides = [1, 1]} : vector<64x1xf32> to vector<32x1xf32>
    %37 = vector.shape_cast %36 : vector<32x1xf32> to vector<1x32x1xf32>
    %cst_14 = arith.constant dense<0.000000e+00> : vector<1xf32>
    %38 = vector.multi_reduction <add>, %37, %cst_14 [1, 2] : vector<1x32x1xf32> to vector<1xf32>
    %39 = vector.shape_cast %38 : vector<1xf32> to vector<1x1x1xf32>
    %40 = vector.extract %39[0, 0, 0] : f32 from vector<1x1x1xf32>
    %41 = vector.extract_strided_slice %35 {offsets = [0, 0], sizes = [32, 1], strides = [1, 1]} : vector<64x1xf32> to vector<32x1xf32>
    %42 = vector.shape_cast %41 : vector<32x1xf32> to vector<1x32x1xf32>
    %cst_15 = arith.constant dense<0.000000e+00> : vector<1xf32>
    %43 = vector.multi_reduction <add>, %42, %cst_15 [1, 2] : vector<1x32x1xf32> to vector<1xf32>
    %44 = vector.shape_cast %43 : vector<1xf32> to vector<1x1x1xf32>
    %45 = vector.extract %44[0, 0, 0] : f32 from vector<1x1x1xf32>
    %cst_16 = arith.constant 0.000000e+00 : f32
    %46 = arith.cmpf ogt, %40, %cst_16 : f32
    %cst_17 = arith.constant 0.000000e+00 : f32
    %47 = arith.subf %cst_17, %45 : f32
    %cst_18 = arith.constant 1.000000e+00 : f32
    %48 = arith.select %46, %40, %cst_18 : f32
    %49 = arith.divf %47, %48 : f32
    %cst_19 = arith.constant 0.000000e+00 : f32
    %50 = arith.select %46, %49, %cst_19 : f32
    %cst_20 = arith.constant 0.000000e+00 : f32
    %51 = arith.addf %cst_20, %50 : f32
    %cst_21 = arith.constant 1.000000e+00 : f32
    %cst_22 = arith.constant 0.000000e+00 : f32
    %52 = arith.select %46, %cst_21, %cst_22 : f32
    %cst_23 = arith.constant 0.000000e+00 : f32
    %53 = arith.addf %cst_23, %52 : f32
    %54 = vector.extract_strided_slice %33 {offsets = [32, 0], sizes = [32, 1], strides = [1, 1]} : vector<64x1xf32> to vector<32x1xf32>
    %55 = vector.shape_cast %54 : vector<32x1xf32> to vector<1x32x1xf32>
    %cst_24 = arith.constant dense<0.000000e+00> : vector<1xf32>
    %56 = vector.multi_reduction <add>, %55, %cst_24 [1, 2] : vector<1x32x1xf32> to vector<1xf32>
    %57 = vector.shape_cast %56 : vector<1xf32> to vector<1x1x1xf32>
    %58 = vector.extract %57[0, 0, 0] : f32 from vector<1x1x1xf32>
    %59 = vector.extract_strided_slice %35 {offsets = [32, 0], sizes = [32, 1], strides = [1, 1]} : vector<64x1xf32> to vector<32x1xf32>
    %60 = vector.shape_cast %59 : vector<32x1xf32> to vector<1x32x1xf32>
    %cst_25 = arith.constant dense<0.000000e+00> : vector<1xf32>
    %61 = vector.multi_reduction <add>, %60, %cst_25 [1, 2] : vector<1x32x1xf32> to vector<1xf32>
    %62 = vector.shape_cast %61 : vector<1xf32> to vector<1x1x1xf32>
    %63 = vector.extract %62[0, 0, 0] : f32 from vector<1x1x1xf32>
    %cst_26 = arith.constant 0.000000e+00 : f32
    %64 = arith.cmpf ogt, %58, %cst_26 : f32
    %cst_27 = arith.constant 0.000000e+00 : f32
    %65 = arith.subf %cst_27, %63 : f32
    %cst_28 = arith.constant 1.000000e+00 : f32
    %66 = arith.select %64, %58, %cst_28 : f32
    %67 = arith.divf %65, %66 : f32
    %cst_29 = arith.constant 0.000000e+00 : f32
    %68 = arith.select %64, %67, %cst_29 : f32
    %69 = arith.addf %51, %68 : f32
    %cst_30 = arith.constant 1.000000e+00 : f32
    %cst_31 = arith.constant 0.000000e+00 : f32
    %70 = arith.select %64, %cst_30, %cst_31 : f32
    %71 = arith.addf %53, %70 : f32
    %72 = tpu.iota {dimensions = array<i32: 2>} : vector<1x8x128xi32>
    %c0_i32 = arith.constant 0 : i32
    %73 = vector.broadcast %c0_i32 : i32 to vector<1x8x128xi32>
    %74 = arith.cmpi eq, %72, %73 : vector<1x8x128xi32>
    %c1_i32 = arith.constant 1 : i32
    %75 = vector.broadcast %c1_i32 : i32 to vector<1x8x128xi32>
    %76 = arith.cmpi eq, %72, %75 : vector<1x8x128xi32>
    %cst_32 = arith.constant 0.000000e+00 : f32
    %77 = vector.broadcast %71 : f32 to vector<1x8x128xf32>
    %78 = vector.broadcast %cst_32 : f32 to vector<1x8x128xf32>
    %79 = arith.select %76, %77, %78 : vector<1x8x128xi1>, vector<1x8x128xf32>
    %80 = vector.broadcast %69 : f32 to vector<1x8x128xf32>
    %81 = arith.select %74, %80, %79 : vector<1x8x128xi1>, vector<1x8x128xf32>
    %c0_33 = arith.constant 0 : index
    %c0_34 = arith.constant 0 : index
    %c0_35 = arith.constant 0 : index
    %82 = vector.load %arg5[%c0_33, %c0_34, %c0_35] : memref<1x8x128xf32, #tpu.memory_space<vmem>>, vector<1x8x128xf32>
    tpu.vector_store %arg5[%c0_33, %c0_34, %c0_35], %81 {strides = array<i32>} : memref<1x8x128xf32, #tpu.memory_space<vmem>>, vector<1x8x128xf32>,
    return
  }
  func.func @transform_0(%arg0: i32) -> (i32, i32) {
    %c0_i32 = arith.constant 0 : i32
    %c0_i32_0 = arith.constant 0 : i32
    return %arg0, %c0_i32 : i32, i32
  }
  func.func @transform_1(%arg0: i32) -> (i32, i32) {
    %c0_i32 = arith.constant 0 : i32
    %c0_i32_0 = arith.constant 0 : i32
    %c0_i32_1 = arith.constant 0 : i32
    return %c0_i32, %c0_i32_0 : i32, i32
  }
  func.func @transform_2(%arg0: i32) -> (i32, i32) {
    %c0_i32 = arith.constant 0 : i32
    %c0_i32_0 = arith.constant 0 : i32
    return %arg0, %c0_i32 : i32, i32
  }
  func.func @transform_3(%arg0: i32) -> (i32, i32) {
    %c0_i32 = arith.constant 0 : i32
    %c0_i32_0 = arith.constant 0 : i32
    %c0_i32_1 = arith.constant 0 : i32
    return %c0_i32, %c0_i32_0 : i32, i32
  }
  func.func @transform_4(%arg0: i32) -> (i32, i32, i32) {
    %c0_i32 = arith.constant 0 : i32
    %c0_i32_0 = arith.constant 0 : i32
    %c0_i32_1 = arith.constant 0 : i32
    return %arg0, %c0_i32, %c0_i32_0 : i32, i32, i32
  }
}

</mosaic_0001>

<llo_original>
// kernel: tpu_custom_call.1
$region0: #{tpu_custom_call.1}
  #allocation0 [shape = 'u32[]', space=smem, size = 0x4, offset = 0x4, fixed_abs, tag = 'smem constant byte address 0x4 - core index']
  #allocation1 [shape = 'u32[144,128]{1,0:T(1,128)}', space=vmem, size = 0x12000, scoped, tag = 'internal scratch']
  %s0 = inlined_call_operand.vmem [shape: bf16[64,32], index: 0, kind: input, shape index: {}]
  %s1 = inlined_call_operand.vmem [shape: bf16[32,64], index: 1, kind: input, shape index: {}]
  %s2 = inlined_call_operand.vmem [shape: s32[64,1], index: 2, kind: input, shape index: {}]
  %s3 = inlined_call_operand.vmem [shape: s32[1,64], index: 3, kind: input, shape index: {}]
  %s4 = inlined_call_operand.hbm [shape: f32[1,8,128], index: 4, kind: output, shape index: {}]
  %s5 = sld [smem:[#allocation0]]
  $region26: #{tpu_custom_call.1} parent=0
    _
  %s7 = ssub.s32 1, %s5
  %s8 = scalar_select 0, %s7, %s5
  $region1: #{tpu_custom_call.1} parent=0
    #allocation2 [shape = 'u8[4096]{0}', space=vmem, size = 0x1000, scoped, tag = 'output window, operand 0, single buffered']
    #allocation3 [shape = 's32[1]{0}', space=sflag, size = 0x4, scoped, tag = 'scoped memory for tpu_custom_call.1']
    %9 = vsyncpa [#allocation3], 0
    // Predicated region
    $region2: #{tpu_custom_call.1} parent=1 // pred_check
      _
    $region3: #{tpu_custom_call.1} parent=1 // pred_check_branch
      %11 = sbr.rel (0) target = $region5
    $region4: #{tpu_custom_call.1} parent=1 // pred_region
      _
    $region5: #{tpu_custom_call.1} parent=1 // pred_fallthru
      _
    // Predicated region
    $region6: #{tpu_custom_call.1} parent=1 // pred_check
      _
    $region7: #{tpu_custom_call.1} parent=1 // pred_check_branch
      %13 = sbr.rel (0) target = $region9
    $region8: #{tpu_custom_call.1} parent=1 // pred_region
      _
    $region9: #{tpu_custom_call.1} parent=1 // pred_fallthru
      _
    // Predicated region
    $region10: #{tpu_custom_call.1} parent=1 // pred_check
      _
    $region11: #{tpu_custom_call.1} parent=1 // pred_check_branch
      %15 = sbr.rel (0) target = $region13
    $region12: #{tpu_custom_call.1} parent=1 // pred_region
      _
    $region13: #{tpu_custom_call.1} parent=1 // pred_fallthru
      _
    // Predicated region
    $region14: #{tpu_custom_call.1} parent=1 // pred_check
      _
    $region15: #{tpu_custom_call.1} parent=1 // pred_check_branch
      %17 = sbr.rel (0) target = $region17
    $region16: #{tpu_custom_call.1} parent=1 // pred_region
      _
    $region17: #{tpu_custom_call.1} parent=1 // pred_fallthru
      _
    %v19 = vld [vmem:[%s0] sm:$0xf]
    %v20 = vld [vmem:[%s0 + $0x4] sm:$0xf]
    %v21 = vld [vmem:[%s0 + $0x8] sm:$0xf]
    %v22 = vld [vmem:[%s0 + $0xc] sm:$0xf]
    %v23 = vld [vmem:[%s0 + $0x10] sm:$0xf]
    %v24 = vld [vmem:[%s0 + $0x14] sm:$0xf]
    %v25 = vld [vmem:[%s0 + $0x18] sm:$0xf]
    %v26 = vld [vmem:[%s0 + $0x1c] sm:$0xf]
    %v27 = vld [vmem:[%s1] sm:$0xf]
    %v28 = vld [vmem:[%s1 + $0x4] sm:$0xf]
    %v29 = vld [vmem:[%s1 + $0x8] sm:$0xf]
    %v30 = vld [vmem:[%s1 + $0xc] sm:$0xf]
    %v39 = vunpack.c.l.b16 %v19
    %v40 = vunpack.c.l.b16 %v20
    %v41 = vunpack.c.l.b16 %v21
    %v42 = vunpack.c.l.b16 %v22
    %v43 = vunpack.c.l.b16 %v23
    %v44 = vunpack.c.l.b16 %v24
    %v45 = vunpack.c.l.b16 %v25
    %v46 = vunpack.c.l.b16 %v26
    %v47 = vpack.c.b16 %v40, %v39
    %v48 = vpack.c.b16 %v42, %v41
    %v49 = vpack.c.b16 %v44, %v43
    %v50 = vpack.c.b16 %v46, %v45
    %v55 = vunpack.c.l.b16 %v27
    %v56 = vunpack.c.l.b16 %v28
    %v57 = vunpack.c.l.b16 %v29
    %v58 = vunpack.c.l.b16 %v30
    %v59 = vpack.c.b16 %v56, %v55
    %v60 = vpack.c.b16 %v58, %v57
    %vm63 = vcmask 261120
    %v65 = vsel %vm63, %v47, 0
    %v68 = vsel %vm63, %v48, 0
    %v71 = vsel %vm63, %v49, 0
    %v74 = vsel %vm63, %v50, 0
    %76 = vmatprep.subr.bf16.mxu0 0
    %77 = vmatpush1.bf16.msra.mxu0 %v59
    %78 = vmatprep.subr.bf16.mxu0 0
    %79 = vmatpush1.bf16.msra.mxu0 %v60
    %80 = vmatprep.subr.bf16.mxu0 0
    %81 = vmatpush1.bf16.msra.mxu0 0
    %82 = vmatprep.subr.bf16.mxu0 0
    %83 = vmatpush1.bf16.msra.mxu0 0
    %84 = vmatprep.subr.bf16.mxu0 0
    %85 = vmatpush1.bf16.msra.mxu0 0
    %86 = vmatprep.subr.bf16.mxu0 0
    %87 = vmatpush1.bf16.msra.mxu0 0
    %88 = vmatprep.subr.bf16.mxu0 0
    %89 = vmatpush1.bf16.msra.mxu0 0
    %90 = vmatprep.subr.bf16.mxu0 0
    %91 = vmatpush1.bf16.msra.mxu0 0
    %92 = vmatprep.subr.bf16.mxu0 0
    %93 = vmatpush1.bf16.msra.mxu0 0
    %94 = vmatprep.subr.bf16.mxu0 0
    %95 = vmatpush1.bf16.msra.mxu0 0
    %96 = vmatprep.subr.bf16.mxu0 0
    %97 = vmatpush1.bf16.msra.mxu0 0
    %98 = vmatprep.subr.bf16.mxu0 0
    %99 = vmatpush1.bf16.msra.mxu0 0
    %100 = vmatprep.subr.bf16.mxu0 0
    %101 = vmatpush1.bf16.msra.mxu0 0
    %102 = vmatprep.subr.bf16.mxu0 0
    %103 = vmatpush1.bf16.msra.mxu0 0
    %104 = vmatprep.subr.bf16.mxu0 0
    %105 = vmatpush1.bf16.msra.mxu0 0
    %106 = vmatprep.subr.bf16.mxu0 0
    %107 = vmatpush1.bf16.msra.mxu0 0
    %108 = vmatprep.mubr.bf16.mxu0 0
    %109 = vmatmul.mubr.bf16.gmra.mrb[0].mxu0 %v65
    %v110 = vpop.f32.mrb[0].mxu0
    %v111 = vadd.f32 0.0, %v110
    %v112 = vpop.f32.mrb[0].mxu0
    %v113 = vpop.f32.mrb[0].mxu0
    %v114 = vadd.f32 0.0, %v113
    %v115 = vpop.f32.mrb[0].mxu0
    %116 = vmatprep.mubr.bf16.mxu0 0
    %117 = vmatmul.mubr.bf16.gmra.mrb[0].mxu0 %v68
    %v118 = vpop.f32.mrb[0].mxu0
    %v119 = vadd.f32 0.0, %v118
    %v120 = vpop.f32.mrb[0].mxu0
    %v121 = vpop.f32.mrb[0].mxu0
    %v122 = vadd.f32 0.0, %v121
    %v123 = vpop.f32.mrb[0].mxu0
    %124 = vmatprep.mubr.bf16.mxu0 0
    %125 = vmatmul.mubr.bf16.gmra.mrb[0].mxu0 %v71
    %v126 = vpop.f32.mrb[0].mxu0
    %v127 = vadd.f32 0.0, %v126
    %v128 = vpop.f32.mrb[0].mxu0
    %v129 = vpop.f32.mrb[0].mxu0
    %v130 = vadd.f32 0.0, %v129
    %v131 = vpop.f32.mrb[0].mxu0
    %132 = vmatprep.mubr.bf16.mxu0 0
    %133 = vmatmul.mubr.bf16.gmra.mrb[0].mxu0 %v74
    %v134 = vpop.f32.mrb[0].mxu0
    %v135 = vadd.f32 0.0, %v134
    %v136 = vpop.f32.mrb[0].mxu0
    %v137 = vpop.f32.mrb[0].mxu0
    %v138 = vadd.f32 0.0, %v137
    %v139 = vpop.f32.mrb[0].mxu0
    %140 = vdwg.mxu0
    %v141 = vld [vmem:[%s2] sm:$0xff]
    %v142 = vld [vmem:[%s2 + $0x8] sm:$0xff]
    %v143 = vld [vmem:[%s2 + $0x10] sm:$0xff]
    %v144 = vld [vmem:[%s2 + $0x18] sm:$0xff]
    %v145 = vld [vmem:[%s2 + $0x20] sm:$0xff]
    %v146 = vld [vmem:[%s2 + $0x28] sm:$0xff]
    %v147 = vld [vmem:[%s2 + $0x30] sm:$0xff]
    %v148 = vld [vmem:[%s2 + $0x38] sm:$0xff]
    %v149 = vld [vmem:[%s3] sm:$0x1]
    %v150 = vlaneseq
    %v151 = vshrl.u32 %v150, 7
    %v152 = vadd.s32 %v151, 8
    %v153 = vadd.s32 %v151, 16
    %v154 = vadd.s32 %v151, 24
    %v155 = vadd.s32 %v151, 32
    %v156 = vadd.s32 %v151, 40
    %v157 = vadd.s32 %v151, 48
    %v158 = vadd.s32 %v151, 56
    %v159 = vand.u32 %v151, 31
    %v160 = vand.u32 %v152, 31
    %v161 = vand.u32 %v153, 31
    %v162 = vand.u32 %v154, 31
    %v163 = vand.u32 %v155, 31
    %v164 = vand.u32 %v156, 31
    %v165 = vand.u32 %v157, 31
    %v166 = vand.u32 %v158, 31
    %v167 = vlaneseq
    %v168 = vand.u32 %v167, 127
    %169 = vset.pattern.permute.xlu0 0
    %170 = vperm.xlu0 %169, %v141
    %v171 = vpop.permute.xlu0 %170
    %172 = vset.pattern.permute.xlu0 0
    %173 = vperm.xlu0 %172, %v142
    %v174 = vpop.permute.xlu0 %173
    %175 = vset.pattern.permute.xlu0 0
    %176 = vperm.xlu0 %175, %v143
    %v177 = vpop.permute.xlu0 %176
    %178 = vset.pattern.permute.xlu0 0
    %179 = vperm.xlu0 %178, %v144
    %v180 = vpop.permute.xlu0 %179
    %181 = vset.pattern.permute.xlu0 0
    %182 = vperm.xlu0 %181, %v145
    %v183 = vpop.permute.xlu0 %182
    %184 = vset.pattern.permute.xlu0 0
    %185 = vperm.xlu0 %184, %v146
    %v186 = vpop.permute.xlu0 %185
    %187 = vset.pattern.permute.xlu0 0
    %188 = vperm.xlu0 %187, %v147
    %v189 = vpop.permute.xlu0 %188
    %190 = vset.pattern.permute.xlu0 0
    %191 = vperm.xlu0 %190, %v148
    %v192 = vpop.permute.xlu0 %191
    %v193 = vlaneseq
    %v194 = vshrl.u32 %v193, 7
    %v195 = vsub.s32 0, %v194
    %v196 = vrot.slane %v149, %v195
    %vm197 = vcmp.eq.s32.totalorder %v171, %v196
    %vm198 = vcmp.eq.s32.totalorder %v174, %v196
    %vm199 = vcmp.eq.s32.totalorder %v177, %v196
    %vm200 = vcmp.eq.s32.totalorder %v180, %v196
    %vm201 = vcmp.eq.s32.totalorder %v183, %v196
    %vm202 = vcmp.eq.s32.totalorder %v186, %v196
    %vm203 = vcmp.eq.s32.totalorder %v189, %v196
    %vm204 = vcmp.eq.s32.totalorder %v192, %v196
    %vm205 = vcmp.ne.s32.totalorder %v168, %v159
    %vm206 = vcmp.ne.s32.totalorder %v168, %v160
    %vm207 = vcmp.ne.s32.totalorder %v168, %v161
    %vm208 = vcmp.ne.s32.totalorder %v168, %v162
    %vm209 = vcmp.ne.s32.totalorder %v168, %v163
    %vm210 = vcmp.ne.s32.totalorder %v168, %v164
    %vm211 = vcmp.ne.s32.totalorder %v168, %v165
    %vm212 = vcmp.ne.s32.totalorder %v168, %v166
    %vm213 = vmand %vm197, %vm205
    %vm214 = vmand %vm198, %vm206
    %vm215 = vmand %vm199, %vm207
    %vm216 = vmand %vm200, %vm208
    %vm217 = vmand %vm201, %vm209
    %vm218 = vmand %vm202, %vm210
    %vm219 = vmand %vm203, %vm211
    %vm220 = vmand %vm204, %vm212
    %vm221 = vcmask 523264
    %v222 = vsel %vm221, %v111, -inf
    %223 = vmax.xlane.f32.xlu0 %v222
    %v224 = vpop.xlane.xlu0 %223
    %v225 = vsel %vm221, %v114, -inf
    %226 = vmax.xlane.f32.xlu0 %v225
    %v227 = vpop.xlane.xlu0 %226
    %v228 = vsel %vm221, %v119, -inf
    %229 = vmax.xlane.f32.xlu0 %v228
    %v230 = vpop.xlane.xlu0 %229
    %v231 = vsel %vm221, %v122, -inf
    %232 = vmax.xlane.f32.xlu0 %v231
    %v233 = vpop.xlane.xlu0 %232
    %v234 = vsel %vm221, %v127, -inf
    %235 = vmax.xlane.f32.xlu0 %v234
    %v236 = vpop.xlane.xlu0 %235
    %v237 = vsel %vm221, %v130, -inf
    %238 = vmax.xlane.f32.xlu0 %v237
    %v239 = vpop.xlane.xlu0 %238
    %v240 = vsel %vm221, %v135, -inf
    %241 = vmax.xlane.f32.xlu0 %v240
    %v242 = vpop.xlane.xlu0 %241
    %v243 = vsel %vm221, %v138, -inf
    %244 = vmax.xlane.f32.xlu0 %v243
    %v245 = vpop.xlane.xlu0 %244
    %v246 = vsub.f32 %v111, %v224
    %v247 = vsub.f32 %v114, %v227
    %v248 = vsub.f32 %v119, %v230
    %v249 = vsub.f32 %v122, %v233
    %v250 = vsub.f32 %v127, %v236
    %v251 = vsub.f32 %v130, %v239
    %v252 = vsub.f32 %v135, %v242
    %v253 = vsub.f32 %v138, %v245
    %v254 = vmul.f32 %v246, 1.442695
    %v255 = vpow.pop %v254
    %v256 = vmul.f32 %v247, 1.442695
    %v257 = vpow.pop %v256
    %v258 = vmul.f32 %v248, 1.442695
    %v259 = vpow.pop %v258
    %v260 = vmul.f32 %v249, 1.442695
    %v261 = vpow.pop %v260
    %v262 = vmul.f32 %v250, 1.442695
    %v263 = vpow.pop %v262
    %v264 = vmul.f32 %v251, 1.442695
    %v265 = vpow.pop %v264
    %v266 = vmul.f32 %v252, 1.442695
    %v267 = vpow.pop %v266
    %v268 = vmul.f32 %v253, 1.442695
    %v269 = vpow.pop %v268
    %v270 = vsel %vm221, %v255, 0.0
    %271 = vadd.xlane.f32.xlu0 %v270
    %v272 = vpop.xlane.xlu0 %271
    %v273 = vsel %vm221, %v257, 0.0
    %274 = vadd.xlane.f32.xlu0 %v273
    %v275 = vpop.xlane.xlu0 %274
    %v276 = vsel %vm221, %v259, 0.0
    %277 = vadd.xlane.f32.xlu0 %v276
    %v278 = vpop.xlane.xlu0 %277
    %v279 = vsel %vm221, %v261, 0.0
    %280 = vadd.xlane.f32.xlu0 %v279
    %v281 = vpop.xlane.xlu0 %280
    %v282 = vsel %vm221, %v263, 0.0
    %283 = vadd.xlane.f32.xlu0 %v282
    %v284 = vpop.xlane.xlu0 %283
    %v285 = vsel %vm221, %v265, 0.0
    %286 = vadd.xlane.f32.xlu0 %v285
    %v287 = vpop.xlane.xlu0 %286
    %v288 = vsel %vm221, %v267, 0.0
    %289 = vadd.xlane.f32.xlu0 %v288
    %v290 = vpop.xlane.xlu0 %289
    %v291 = vsel %vm221, %v269, 0.0
    %292 = vadd.xlane.f32.xlu0 %v291
    %v293 = vpop.xlane.xlu0 %292
    %v294 = vlog2.pop %v272
    %v295 = vmul.f32 %v294, 0.6931472
    %v296 = vlog2.pop %v275
    %v297 = vmul.f32 %v296, 0.6931472
    %v298 = vlog2.pop %v278
    %v299 = vmul.f32 %v298, 0.6931472
    %v300 = vlog2.pop %v281
    %v301 = vmul.f32 %v300, 0.6931472
    %v302 = vlog2.pop %v284
    %v303 = vmul.f32 %v302, 0.6931472
    %v304 = vlog2.pop %v287
    %v305 = vmul.f32 %v304, 0.6931472
    %v306 = vlog2.pop %v290
    %v307 = vmul.f32 %v306, 0.6931472
    %v308 = vlog2.pop %v293
    %v309 = vmul.f32 %v308, 0.6931472
    %v310 = vadd.f32 %v224, %v295
    %v311 = vadd.f32 %v227, %v297
    %v312 = vadd.f32 %v230, %v299
    %v313 = vadd.f32 %v233, %v301
    %v314 = vadd.f32 %v236, %v303
    %v315 = vadd.f32 %v239, %v305
    %v316 = vadd.f32 %v242, %v307
    %v317 = vadd.f32 %v245, %v309
    %v318 = vsel %vm213, %v111, 0.0
    %v319 = vsel %vm214, %v114, 0.0
    %v320 = vsel %vm215, %v119, 0.0
    %v321 = vsel %vm216, %v122, 0.0
    %v322 = vsel %vm217, %v127, 0.0
    %v323 = vsel %vm218, %v130, 0.0
    %v324 = vsel %vm219, %v135, 0.0
    %v325 = vsel %vm220, %v138, 0.0
    %v326 = vsel %vm221, %v318, 0.0
    %327 = vadd.xlane.f32.xlu0 %v326
    %v328 = vpop.xlane.xlu0 %327
    %v329 = vsel %vm221, %v319, 0.0
    %330 = vadd.xlane.f32.xlu0 %v329
    %v331 = vpop.xlane.xlu0 %330
    %v332 = vsel %vm221, %v320, 0.0
    %333 = vadd.xlane.f32.xlu0 %v332
    %v334 = vpop.xlane.xlu0 %333
    %v335 = vsel %vm221, %v321, 0.0
    %336 = vadd.xlane.f32.xlu0 %v335
    %v337 = vpop.xlane.xlu0 %336
    %v338 = vsel %vm221, %v322, 0.0
    %339 = vadd.xlane.f32.xlu0 %v338
    %v340 = vpop.xlane.xlu0 %339
    %v341 = vsel %vm221, %v323, 0.0
    %342 = vadd.xlane.f32.xlu0 %v341
    %v343 = vpop.xlane.xlu0 %342
    %v344 = vsel %vm221, %v324, 0.0
    %345 = vadd.xlane.f32.xlu0 %v344
    %v346 = vpop.xlane.xlu0 %345
    %v347 = vsel %vm221, %v325, 0.0
    %348 = vadd.xlane.f32.xlu0 %v347
    %v349 = vpop.xlane.xlu0 %348
    %v350 = vsel %vm213, 1.0, 0.0
    %v351 = vsel %vm214, 1.0, 0.0
    %v352 = vsel %vm215, 1.0, 0.0
    %v353 = vsel %vm216, 1.0, 0.0
    %v354 = vsel %vm217, 1.0, 0.0
    %v355 = vsel %vm218, 1.0, 0.0
    %v356 = vsel %vm219, 1.0, 0.0
    %v357 = vsel %vm220, 1.0, 0.0
    %v358 = vsel %vm221, %v350, 0.0
    %359 = vadd.xlane.f32.xlu0 %v358
    %v360 = vpop.xlane.xlu0 %359
    %v361 = vsel %vm221, %v351, 0.0
    %362 = vadd.xlane.f32.xlu0 %v361
    %v363 = vpop.xlane.xlu0 %362
    %v364 = vsel %vm221, %v352, 0.0
    %365 = vadd.xlane.f32.xlu0 %v364
    %v366 = vpop.xlane.xlu0 %365
    %v367 = vsel %vm221, %v353, 0.0
    %368 = vadd.xlane.f32.xlu0 %v367
    %v369 = vpop.xlane.xlu0 %368
    %v370 = vsel %vm221, %v354, 0.0
    %371 = vadd.xlane.f32.xlu0 %v370
    %v372 = vpop.xlane.xlu0 %371
    %v373 = vsel %vm221, %v355, 0.0
    %374 = vadd.xlane.f32.xlu0 %v373
    %v375 = vpop.xlane.xlu0 %374
    %v376 = vsel %vm221, %v356, 0.0
    %377 = vadd.xlane.f32.xlu0 %v376
    %v378 = vpop.xlane.xlu0 %377
    %v379 = vsel %vm221, %v357, 0.0
    %380 = vadd.xlane.f32.xlu0 %v379
    %v381 = vpop.xlane.xlu0 %380
    %v382 = vmul.f32 %v310, %v360
    %v383 = vmul.f32 %v311, %v363
    %v384 = vmul.f32 %v312, %v366
    %v385 = vmul.f32 %v313, %v369
    %v386 = vmul.f32 %v314, %v372
    %v387 = vmul.f32 %v315, %v375
    %v388 = vmul.f32 %v316, %v378
    %v389 = vmul.f32 %v317, %v381
    %v390 = vsub.f32 %v328, %v382
    %v391 = vsub.f32 %v331, %v383
    %v392 = vsub.f32 %v334, %v384
    %v393 = vsub.f32 %v337, %v385
    %v394 = vsub.f32 %v340, %v386
    %v395 = vsub.f32 %v343, %v387
    %v396 = vsub.f32 %v346, %v388
    %v397 = vsub.f32 %v349, %v389
    %vm398 = vcmask 7168
    %v399 = vsel %vm398, %v360, 0.0
    %v400 = vsel %vm398, %v363, 0.0
    %v401 = vadd.f32 %v399, %v400
    %v402 = vsel %vm398, %v366, 0.0
    %v403 = vadd.f32 %v401, %v402
    %v404 = vsel %vm398, %v369, 0.0
    %v405 = vadd.f32 %v403, %v404
    %406 = vadd.xlane.f32.xlu0 %v405
    %v407 = vpop.xlane.xlu0 %406
    %v408 = vrot.slane %v407, 4
    %v409 = vadd.f32 %v407, %v408
    %v410 = vrot.slane %v409, 2
    %v411 = vadd.f32 %v409, %v410
    %v412 = vrot.slane %v411, 1
    %v413 = vadd.f32 %v411, %v412
    %s414 = vtos %v413
    %v415 = vsel %vm398, %v390, 0.0
    %v416 = vsel %vm398, %v391, 0.0
    %v417 = vadd.f32 %v415, %v416
    %v418 = vsel %vm398, %v392, 0.0
    %v419 = vadd.f32 %v417, %v418
    %v420 = vsel %vm398, %v393, 0.0
    %v421 = vadd.f32 %v419, %v420
    %422 = vadd.xlane.f32.xlu0 %v421
    %v423 = vpop.xlane.xlu0 %422
    %v424 = vrot.slane %v423, 4
    %v425 = vadd.f32 %v423, %v424
    %v426 = vrot.slane %v425, 2
    %v427 = vadd.f32 %v425, %v426
    %v428 = vrot.slane %v427, 1
    %v429 = vadd.f32 %v427, %v428
    %s430 = vtos %v429
    %p431 = scmp.gt.f32.partialorder %s414, 0.0
    %s432 = ssub.f32 0.0, %s430
    %s433 = scalar_select %p431, %s414, 1.0
    %v434 = vstv %s433
    %v435 = vrcp.pop %v434
    %s436 = vtos %v435
    %s437 = smul.f32 %s432, %s436
    %s438 = scalar_select %p431, %s437, 0.0
    %s439 = sadd.f32 %s438, 0.0
    %s440 = scalar_select %p431, 1.0, 0.0
    %s441 = sadd.f32 %s440, 0.0
    %v442 = vsel %vm398, %v372, 0.0
    %v443 = vsel %vm398, %v375, 0.0
    %v444 = vadd.f32 %v442, %v443
    %v445 = vsel %vm398, %v378, 0.0
    %v446 = vadd.f32 %v444, %v445
    %v447 = vsel %vm398, %v381, 0.0
    %v448 = vadd.f32 %v446, %v447
    %449 = vadd.xlane.f32.xlu0 %v448
    %v450 = vpop.xlane.xlu0 %449
    %v451 = vrot.slane %v450, 4
    %v452 = vadd.f32 %v450, %v451
    %v453 = vrot.slane %v452, 2
    %v454 = vadd.f32 %v452, %v453
    %v455 = vrot.slane %v454, 1
    %v456 = vadd.f32 %v454, %v455
    %s457 = vtos %v456
    %v458 = vsel %vm398, %v394, 0.0
    %v459 = vsel %vm398, %v395, 0.0
    %v460 = vadd.f32 %v458, %v459
    %v461 = vsel %vm398, %v396, 0.0
    %v462 = vadd.f32 %v460, %v461
    %v463 = vsel %vm398, %v397, 0.0
    %v464 = vadd.f32 %v462, %v463
    %465 = vadd.xlane.f32.xlu0 %v464
    %v466 = vpop.xlane.xlu0 %465
    %v467 = vrot.slane %v466, 4
    %v468 = vadd.f32 %v466, %v467
    %v469 = vrot.slane %v468, 2
    %v470 = vadd.f32 %v468, %v469
    %v471 = vrot.slane %v470, 1
    %v472 = vadd.f32 %v470, %v471
    %s473 = vtos %v472
    %p474 = scmp.gt.f32.partialorder %s457, 0.0
    %s475 = ssub.f32 0.0, %s473
    %s476 = scalar_select %p474, %s457, 1.0
    %v477 = vstv %s476
    %v478 = vrcp.pop %v477
    %s479 = vtos %v478
    %s480 = smul.f32 %s475, %s479
    %s481 = scalar_select %p474, %s480, 0.0
    %s482 = sadd.f32 %s439, %s481
    %s483 = scalar_select %p474, 1.0, 0.0
    %s484 = sadd.f32 %s441, %s483
    %vm485 = vcmp.eq.s32.totalorder %v168, 0
    %vm486 = vcmp.eq.s32.totalorder %v168, 1
    %v487 = vstv %s484
    %v488 = vsel %vm486, %v487, 0.0
    %v489 = vstv %s482
    %v490 = vsel %vm485, %v489, %v488
    %491 = vst [vmem:[#allocation2] sm:$0xff] %v490
    // Predicated region
    $region18: #{tpu_custom_call.1} parent=1 // pred_check
      _
    $region19: #{tpu_custom_call.1} parent=1 // pred_check_branch
      %493 = sbr.rel (0) target = $region21
    $region20: #{tpu_custom_call.1} parent=1 // pred_region
      %s495 = ssub.s32 128, 128
      %496 = vsyncadd [#allocation3], %s495
      %s498 = sshll.u32 [#allocation2], 4
      %s499 = int_to_ptr.vmem [resolvable:$true] %s498
      %501 = dma.vmem_to_hbm [thread:$0]  %s499, 128, %s4, [#allocation3]
    $region21: #{tpu_custom_call.1} parent=1 // pred_fallthru
      _
    // Predicated region
    $region22: #{tpu_custom_call.1} parent=1 // pred_check
      _
    $region23: #{tpu_custom_call.1} parent=1 // pred_check_branch
      %503 = sbr.rel (0) target = $region25
    $region24: #{tpu_custom_call.1} parent=1 // pred_region
      %504 = dma.done [#allocation3], 128
    $region25: #{tpu_custom_call.1} parent=1 // pred_fallthru
      _
    %505 = vsyncpa [#allocation3], 1

</llo_original>
